<compile_context>
chip_gen: v5e
topology: v5e:2x2
jax: 0.10.0
libtpu: 0.0.40
codegen_flags: <defaults>
</compile_context>

<pallas_src>
import functools
import math

import jax
import jax.numpy as jnp
from jax.experimental import pallas as pl
from jax.experimental.pallas import tpu as pltpu

_LOG2PI = math.log(2.0 * math.pi)


def _vae_kernel(x_ref, eps_ref,
                we_ref, be_ref,
                wh_ref, bh_ref,          # fused (H, 2*Dz) mu/log_var head
                wd1_ref, bd1_ref,
                wd2_ref, bd2_ref,
                loss_ref,
                *, dz, inv_batch):
    """Processes one batch tile; accumulates sum_b(RE[b] + KL_row[b]) into loss_ref."""
    step = pl.program_id(0)

    @pl.when(step == 0)
    def _init():
        loss_ref[...] = jnp.zeros_like(loss_ref)

    x = x_ref[...]                                    # (TB, D)  f32
    eps = eps_ref[...]                                # (TB, Dz) f32
    tb, d = x.shape

    # ---- encoder.encode(x): h = tanh(x We + be); bf16 operands on the MXU ----
    h = jnp.tanh(
        jnp.dot(x.astype(jnp.bfloat16), we_ref[...],
                preferred_element_type=jnp.float32) + be_ref[...])      # (TB, H) f32

    # ---- fused (mu_e | log_var_e) head: one lane-dense matmul, then slice ----
    head = jnp.dot(h.astype(jnp.bfloat16), wh_ref[...],
                   preferred_element_type=jnp.float32) + bh_ref[...]    # (TB, 2*Dz)
    mu_e = head[:, :dz]
    log_var_e = head[:, dz:]

    # ---- encoder.sample(mu_e, log_var_e=exp(log_var_e)) (reference quirk) ----
    ev = jnp.exp(log_var_e)                 # reused: also sigma of q(z|x) below
    z = mu_e + jnp.exp(0.5 * ev) * eps      # (TB, Dz)

    # ---- decoder.log_prob(x, z): unit-variance Gaussian MLP ----
    hd = jnp.tanh(
        jnp.dot(z.astype(jnp.bfloat16), wd1_ref[...],
                preferred_element_type=jnp.float32) + bd1_ref[...])     # (TB, H)
    x_hat = jnp.dot(hd.astype(jnp.bfloat16), wd2_ref[...],
                    preferred_element_type=jnp.float32) + bd2_ref[...]  # (TB, D)

    # sum_b RE[b]  (log-normal constant hoisted out of the (TB, D) reduction)
    diff = x - x_hat
    re_sum = -0.5 * _LOG2PI * (tb * d) - 0.5 * jnp.sum(diff * diff)

    # sum_b KL[b]: KL( N(mu_e, sigma=ev) || N(0,1) );  -log(sigma) == -log_var_e
    kl_sum = jnp.sum(0.5 * (ev * ev + mu_e * mu_e) - log_var_e) - 0.5 * (tb * dz)

    loss_ref[...] += re_sum + kl_sum

    @pl.when(step == pl.num_programs(0) - 1)
    def _finalize():
        # mean_b(-(RE[b] + mean_b' KL_row)) == -(sum RE + sum KL_row) / B
        loss_ref[...] = -loss_ref[...] * inv_batch


def vae_forward(x_nchw, params, eps, *, batch_tile=None):
    B = x_nchw.shape[0]
    x_flat = x_nchw.reshape(B, -1).astype(jnp.float32)      # x.view(B, -1)
    D = x_flat.shape[1]
    Dz = eps.shape[1]
    H = params["we"].shape[1]

    if batch_tile is None:
        batch_tile = min(B, 128)
    assert B % batch_tile == 0, "batch must be divisible by the batch tile"
    nb = B // batch_tile

    # Weights go to VMEM in bf16 (MXU-native, half the DMA); biases stay f32.
    bf16, f32 = jnp.bfloat16, jnp.float32
    we = params["we"].astype(bf16)
    wh = jnp.concatenate([params["wmu"], params["wlv"]], axis=1).astype(bf16)
    bh = jnp.concatenate([params["bmu"], params["blv"]], axis=1).astype(f32)
    wd1 = params["wd1"].astype(bf16)
    wd2 = params["wd2"].astype(bf16)
    be = params["be"].astype(f32)
    bd1 = params["bd1"].astype(f32)
    bd2 = params["bd2"].astype(f32)

    kernel = functools.partial(_vae_kernel, dz=Dz, inv_batch=1.0 / B)

    def resident(shape):
        # Weights/biases: constant block index -> fetched once, resident in VMEM.
        return pl.BlockSpec(shape, lambda i: (0,) * len(shape))

    flops = int(2 * B * (D * H + H * (2 * Dz) + Dz * H + H * D))
    transcendentals = int(B * (2 * H + 2 * Dz))              # tanh x2, exp x2
    bytes_accessed = int(
        x_flat.size * 4 + eps.size * 4
        + (we.size + wh.size + wd1.size + wd2.size) * 2
        + (be.size + bh.size + bd1.size + bd2.size) * 4 + 4)

    out = pl.pallas_call(
        kernel,
        out_shape=jax.ShapeDtypeStruct((1, 1), jnp.float32),
        grid_spec=pltpu.PrefetchScalarGridSpec(
            num_scalar_prefetch=0,
            grid=(nb,),
            in_specs=[
                pl.BlockSpec((batch_tile, D), lambda i: (i, 0)),    # x tile
                pl.BlockSpec((batch_tile, Dz), lambda i: (i, 0)),   # eps tile
                resident((D, H)), resident((1, H)),                 # we, be
                resident((H, 2 * Dz)), resident((1, 2 * Dz)),       # fused head
                resident((Dz, H)), resident((1, H)),                # wd1, bd1
                resident((H, D)), resident((1, D)),                 # wd2, bd2
            ],
            out_specs=pl.BlockSpec((1, 1), lambda i: (0, 0)),       # accumulator
        ),
        compiler_params=pltpu.CompilerParams(
            dimension_semantics=("arbitrary",)),                    # batch = reduction axis
        cost_estimate=pl.CostEstimate(
            flops=flops, transcendentals=transcendentals,
            bytes_accessed=bytes_accessed),
    )(x_flat, eps, we, be, wh, bh, wd1, bd1, wd2, bd2)
    return out[0, 0]


def vae_forward_ref(x_nchw, params, eps):
    """Pure-JAX f32 reference mirroring the kernel / PyTorch semantics."""
    B = x_nchw.shape[0]
    x = x_nchw.reshape(B, -1).astype(jnp.float32)
    h = jnp.tanh(x @ params["we"] + params["be"])
    mu_e = h @ params["wmu"] + params["bmu"]
    log_var_e = h @ params["wlv"] + params["blv"]
    z = mu_e + jnp.exp(0.5 * jnp.exp(log_var_e)) * eps
    hd = jnp.tanh(z @ params["wd1"] + params["bd1"])
    x_hat = hd @ params["wd2"] + params["bd2"]
    re = jnp.sum(-0.5 * _LOG2PI - 0.5 * (x - x_hat) ** 2, axis=-1)
    sigma = jnp.exp(log_var_e)
    kl = jnp.mean(jnp.sum(-jnp.log(sigma) + 0.5 * (sigma * sigma + mu_e * mu_e) - 0.5,
                          axis=-1))
    return jnp.mean(-(re + kl))


def init_params(key, D, H, Dz):
    ks = jax.random.split(key, 6)
    scale = 0.05
    f32 = jnp.float32
    return {
        "we":  scale * jax.random.normal(ks[0], (D, H), f32),
        "be":  jnp.zeros((1, H), f32),
        "wmu": scale * jax.random.normal(ks[1], (H, Dz), f32),
        "bmu": jnp.zeros((1, Dz), f32),
        "wlv": scale * jax.random.normal(ks[2], (H, Dz), f32),
        "blv": jnp.zeros((1, Dz), f32),
        "wd1": scale * jax.random.normal(ks[3], (Dz, H), f32),
        "bd1": jnp.zeros((1, H), f32),
        "wd2": scale * jax.random.normal(ks[4], (H, D), f32),
        "bd2": jnp.zeros((1, D), f32),
    }


if __name__ == "__main__":
    key = jax.random.PRNGKey(0)
    k_x, k_eps, k_p = jax.random.split(key, 3)

    B, C, Himg, Wimg = 16, 1, 8, 8         # x: (B, C, H, W), NCHW
    D = C * Himg * Wimg                    # flattened dim = 64
    Hd, Dz = 32, 16                        # hidden / latent dims

    x = jax.random.normal(k_x, (B, C, Himg, Wimg), jnp.float32)
    eps = jax.random.normal(k_eps, (B, Dz), jnp.float32)   # reparam noise
    params = init_params(k_p, D, Hd, Dz)

    # batch_tile=8 -> grid=(2,): exercises the pl.when init / accumulate / finalize path.
    loss = vae_forward(x, params, eps, batch_tile=8)
    jax.block_until_ready(loss)

    # sanity: finite scalar (mirrors the NaN check in the reference forward)
    assert jnp.isfinite(loss).item(), "loss is not finite"

    # correctness vs. pure-f32 reference (loose tolerance for bf16 matmuls)
    ref = vae_forward_ref(x, params, eps)
    assert jnp.allclose(loss, ref, rtol=5e-2, atol=5e-2), (loss, ref)

    print("KERNEL_OK")
</pallas_src>

<mosaic_0001>
module attributes {stable_mosaic.version = 11 : i64} {
  func.func @_vae_kernel(%arg0: i32, %arg1: memref<8x64xf32, #tpu.memory_space<vmem>>, %arg2: memref<8x16xf32, #tpu.memory_space<vmem>>, %arg3: memref<64x32xbf16, #tpu.memory_space<vmem>>, %arg4: memref<1x32xf32, #tpu.memory_space<vmem>>, %arg5: memref<32x32xbf16, #tpu.memory_space<vmem>>, %arg6: memref<1x32xf32, #tpu.memory_space<vmem>>, %arg7: memref<16x32xbf16, #tpu.memory_space<vmem>>, %arg8: memref<1x32xf32, #tpu.memory_space<vmem>>, %arg9: memref<32x64xbf16, #tpu.memory_space<vmem>>, %arg10: memref<1x64xf32, #tpu.memory_space<vmem>>, %arg11: memref<1x1xf32, #tpu.memory_space<vmem>>) attributes {dimension_semantics = [#tpu.dimension_semantics<arbitrary>], iteration_bounds = array<i64: 2>, scalar_prefetch = 0 : i64, scratch_operands = 0 : i64, tpu.core_type = #tpu.core_type<tc>, window_params = [{transform_indices = @transform_0, window_bounds = array<i64: 8, 64>}, {transform_indices = @transform_1, window_bounds = array<i64: 8, 16>}, {pipeline_mode = #tpu.pipeline_mode<synchronous>, transform_indices = @transform_2, window_bounds = array<i64: 64, 32>}, {pipeline_mode = #tpu.pipeline_mode<synchronous>, transform_indices = @transform_3, window_bounds = array<i64: 1, 32>}, {pipeline_mode = #tpu.pipeline_mode<synchronous>, transform_indices = @transform_4, window_bounds = array<i64: 32, 32>}, {pipeline_mode = #tpu.pipeline_mode<synchronous>, transform_indices = @transform_5, window_bounds = array<i64: 1, 32>}, {pipeline_mode = #tpu.pipeline_mode<synchronous>, transform_indices = @transform_6, window_bounds = array<i64: 16, 32>}, {pipeline_mode = #tpu.pipeline_mode<synchronous>, transform_indices = @transform_7, window_bounds = array<i64: 1, 32>}, {pipeline_mode = #tpu.pipeline_mode<synchronous>, transform_indices = @transform_8, window_bounds = array<i64: 32, 64>}, {pipeline_mode = #tpu.pipeline_mode<synchronous>, transform_indices = @transform_9, window_bounds = array<i64: 1, 64>}, {pipeline_mode = #tpu.pipeline_mode<synchronous>, transform_indices = @transform_10, window_bounds = array<i64: 1, 1>}]} {
    %c0_i32 = arith.constant 0 : i32
    %0 = arith.cmpi eq, %arg0, %c0_i32 : i32
    %1 = arith.extui %0 : i1 to i32
    %c0_i32_0 = arith.constant 0 : i32
    %2 = arith.cmpi ne, %1, %c0_i32_0 : i32
    scf.if %2 {
      %cst_35 = arith.constant 0.000000e+00 : f32
      %66 = vector.broadcast %cst_35 : f32 to vector<1x1xf32>
      %c0_36 = arith.constant 0 : index
      %c0_37 = arith.constant 0 : index
      %67 = vector.load %arg11[%c0_36, %c0_37] : memref<1x1xf32, #tpu.memory_space<vmem>>, vector<1x1xf32>
      tpu.vector_store %arg11[%c0_36, %c0_37], %66 {strides = array<i32>} : memref<1x1xf32, #tpu.memory_space<vmem>>, vector<1x1xf32>,
    } else {
    }
    %c0 = arith.constant 0 : index
    %c0_1 = arith.constant 0 : index
    %3 = vector.load %arg1[%c0, %c0_1] : memref<8x64xf32, #tpu.memory_space<vmem>>, vector<8x64xf32>
    %c0_2 = arith.constant 0 : index
    %c0_3 = arith.constant 0 : index
    %4 = vector.load %arg2[%c0_2, %c0_3] : memref<8x16xf32, #tpu.memory_space<vmem>>, vector<8x16xf32>
    %5 = arith.truncf %3 : vector<8x64xf32> to vector<8x64xbf16>
    %c0_4 = arith.constant 0 : index
    %c0_5 = arith.constant 0 : index
    %6 = vector.load %arg3[%c0_4, %c0_5] : memref<64x32xbf16, #tpu.memory_space<vmem>>, vector<64x32xbf16>
    %cst = arith.constant dense<0.000000e+00> : vector<8x32xf32>
    %7 = tpu.matmul %5, %6, %cst {dimension_numbers = #tpu.dot_dimension_numbers<[1], [0], [0], [1], [0, 0, 1, 1], [], []>} : vector<8x64xbf16>, vector<64x32xbf16>, vector<8x32xf32> -> vector<8x32xf32>
    %c0_6 = arith.constant 0 : index
    %c0_7 = arith.constant 0 : index
    %8 = vector.load %arg4[%c0_6, %c0_7] : memref<1x32xf32, #tpu.memory_space<vmem>>, vector<1x32xf32>
    %9 = vector.broadcast %8 : vector<1x32xf32> to vector<8x32xf32>
    %10 = arith.addf %7, %9 : vector<8x32xf32>
    %11 = math.tanh %10 : vector<8x32xf32>
    %12 = arith.truncf %11 : vector<8x32xf32> to vector<8x32xbf16>
    %c0_8 = arith.constant 0 : index
    %c0_9 = arith.constant 0 : index
    %13 = vector.load %arg5[%c0_8, %c0_9] : memref<32x32xbf16, #tpu.memory_space<vmem>>, vector<32x32xbf16>
    %cst_10 = arith.constant dense<0.000000e+00> : vector<8x32xf32>
    %14 = tpu.matmul %12, %13, %cst_10 {dimension_numbers = #tpu.dot_dimension_numbers<[1], [0], [0], [1], [0, 0, 1, 1], [], []>} : vector<8x32xbf16>, vector<32x32xbf16>, vector<8x32xf32> -> vector<8x32xf32>
    %c0_11 = arith.constant 0 : index
    %c0_12 = arith.constant 0 : index
    %15 = vector.load %arg6[%c0_11, %c0_12] : memref<1x32xf32, #tpu.memory_space<vmem>>, vector<1x32xf32>
    %16 = vector.broadcast %15 : vector<1x32xf32> to vector<8x32xf32>
    %17 = arith.addf %14, %16 : vector<8x32xf32>
    %18 = vector.extract_strided_slice %17 {offsets = [0, 0], sizes = [8, 16], strides = [1, 1]} : vector<8x32xf32> to vector<8x16xf32>
    %19 = vector.extract_strided_slice %17 {offsets = [0, 16], sizes = [8, 16], strides = [1, 1]} : vector<8x32xf32> to vector<8x16xf32>
    %20 = math.exp %19 : vector<8x16xf32>
    %cst_13 = arith.constant 5.000000e-01 : f32
    %21 = vector.broadcast %cst_13 : f32 to vector<8x16xf32>
    %22 = arith.mulf %21, %20 : vector<8x16xf32>
    %23 = math.exp %22 : vector<8x16xf32>
    %24 = arith.mulf %23, %4 : vector<8x16xf32>
    %25 = arith.addf %18, %24 : vector<8x16xf32>
    %26 = arith.truncf %25 : vector<8x16xf32> to vector<8x16xbf16>
    %c0_14 = arith.constant 0 : index
    %c0_15 = arith.constant 0 : index
    %27 = vector.load %arg7[%c0_14, %c0_15] : memref<16x32xbf16, #tpu.memory_space<vmem>>, vector<16x32xbf16>
    %cst_16 = arith.constant dense<0.000000e+00> : vector<8x32xf32>
    %28 = tpu.matmul %26, %27, %cst_16 {dimension_numbers = #tpu.dot_dimension_numbers<[1], [0], [0], [1], [0, 0, 1, 1], [], []>} : vector<8x16xbf16>, vector<16x32xbf16>, vector<8x32xf32> -> vector<8x32xf32>
    %c0_17 = arith.constant 0 : index
    %c0_18 = arith.constant 0 : index
    %29 = vector.load %arg8[%c0_17, %c0_18] : memref<1x32xf32, #tpu.memory_space<vmem>>, vector<1x32xf32>
    %30 = vector.broadcast %29 : vector<1x32xf32> to vector<8x32xf32>
    %31 = arith.addf %28, %30 : vector<8x32xf32>
    %32 = math.tanh %31 : vector<8x32xf32>
    %33 = arith.truncf %32 : vector<8x32xf32> to vector<8x32xbf16>
    %c0_19 = arith.constant 0 : index
    %c0_20 = arith.constant 0 : index
    %34 = vector.load %arg9[%c0_19, %c0_20] : memref<32x64xbf16, #tpu.memory_space<vmem>>, vector<32x64xbf16>
    %cst_21 = arith.constant dense<0.000000e+00> : vector<8x64xf32>
    %35 = tpu.matmul %33, %34, %cst_21 {dimension_numbers = #tpu.dot_dimension_numbers<[1], [0], [0], [1], [0, 0, 1, 1], [], []>} : vector<8x32xbf16>, vector<32x64xbf16>, vector<8x64xf32> -> vector<8x64xf32>
    %c0_22 = arith.constant 0 : index
    %c0_23 = arith.constant 0 : index
    %36 = vector.load %arg10[%c0_22, %c0_23] : memref<1x64xf32, #tpu.memory_space<vmem>>, vector<1x64xf32>
    %37 = vector.broadcast %36 : vector<1x64xf32> to vector<8x64xf32>
    %38 = arith.addf %35, %37 : vector<8x64xf32>
    %39 = arith.subf %3, %38 : vector<8x64xf32>
    %40 = arith.mulf %39, %39 : vector<8x64xf32>
    %41 = vector.shape_cast %40 : vector<8x64xf32> to vector<1x8x64xf32>
    %cst_24 = arith.constant dense<0.000000e+00> : vector<1xf32>
    %42 = vector.multi_reduction <add>, %41, %cst_24 [1, 2] : vector<1x8x64xf32> to vector<1xf32>
    %43 = vector.shape_cast %42 : vector<1xf32> to vector<1x1x1xf32>
    %44 = vector.extract %43[0, 0, 0] : f32 from vector<1x1x1xf32>
    %cst_25 = arith.constant 5.000000e-01 : f32
    %45 = arith.mulf %cst_25, %44 : f32
    %cst_26 = arith.constant -470.496521 : f32
    %46 = arith.subf %cst_26, %45 : f32
    %47 = arith.mulf %20, %20 : vector<8x16xf32>
    %48 = arith.mulf %18, %18 : vector<8x16xf32>
    %49 = arith.addf %47, %48 : vector<8x16xf32>
    %cst_27 = arith.constant 5.000000e-01 : f32
    %50 = vector.broadcast %cst_27 : f32 to vector<8x16xf32>
    %51 = arith.mulf %50, %49 : vector<8x16xf32>
    %52 = arith.subf %51, %19 : vector<8x16xf32>
    %53 = vector.shape_cast %52 : vector<8x16xf32> to vector<1x8x16xf32>
    %cst_28 = arith.constant dense<0.000000e+00> : vector<1xf32>
    %54 = vector.multi_reduction <add>, %53, %cst_28 [1, 2] : vector<1x8x16xf32> to vector<1xf32>
    %55 = vector.shape_cast %54 : vector<1xf32> to vector<1x1x1xf32>
    %56 = vector.extract %55[0, 0, 0] : f32 from vector<1x1x1xf32>
    %cst_29 = arith.constant 6.400000e+01 : f32
    %57 = arith.subf %56, %cst_29 : f32
    %c0_30 = arith.constant 0 : index
    %c0_31 = arith.constant 0 : index
    %58 = vector.load %arg11[%c0_30, %c0_31] : memref<1x1xf32, #tpu.memory_space<vmem>>, vector<1x1xf32>
    %59 = arith.addf %46, %57 : f32
    %60 = vector.broadcast %59 : f32 to vector<1x1xf32>
    %61 = arith.addf %58, %60 : vector<1x1xf32>
    %c0_32 = arith.constant 0 : index
    %c0_33 = arith.constant 0 : index
    %62 = vector.load %arg11[%c0_32, %c0_33] : memref<1x1xf32, #tpu.memory_space<vmem>>, vector<1x1xf32>
    tpu.vector_store %arg11[%c0_32, %c0_33], %61 {strides = array<i32>} : memref<1x1xf32, #tpu.memory_space<vmem>>, vector<1x1xf32>,
    %c1_i32 = arith.constant 1 : i32
    %63 = arith.cmpi eq, %arg0, %c1_i32 : i32
    %64 = arith.extui %63 : i1 to i32
    %c0_i32_34 = arith.constant 0 : i32
    %65 = arith.cmpi ne, %64, %c0_i32_34 : i32
    scf.if %65 {
      %c0_35 = arith.constant 0 : index
      %c0_36 = arith.constant 0 : index
      %66 = vector.load %arg11[%c0_35, %c0_36] : memref<1x1xf32, #tpu.memory_space<vmem>>, vector<1x1xf32>
      %cst_37 = arith.constant 0.000000e+00 : f32
      %67 = vector.broadcast %cst_37 : f32 to vector<1x1xf32>
      %68 = arith.subf %67, %66 : vector<1x1xf32>
      %cst_38 = arith.constant 6.250000e-02 : f32
      %69 = vector.broadcast %cst_38 : f32 to vector<1x1xf32>
      %70 = arith.mulf %68, %69 : vector<1x1xf32>
      %c0_39 = arith.constant 0 : index
      %c0_40 = arith.constant 0 : index
      %71 = vector.load %arg11[%c0_39, %c0_40] : memref<1x1xf32, #tpu.memory_space<vmem>>, vector<1x1xf32>
      tpu.vector_store %arg11[%c0_39, %c0_40], %70 {strides = array<i32>} : memref<1x1xf32, #tpu.memory_space<vmem>>, vector<1x1xf32>,
    } else {
    }
    return
  }
  func.func @transform_0(%arg0: i32) -> (i32, i32) {
    %c0_i32 = arith.constant 0 : i32
    %c0_i32_0 = arith.constant 0 : i32
    return %arg0, %c0_i32 : i32, i32
  }
  func.func @transform_1(%arg0: i32) -> (i32, i32) {
    %c0_i32 = arith.constant 0 : i32
    %c0_i32_0 = arith.constant 0 : i32
    return %arg0, %c0_i32 : i32, i32
  }
  func.func @transform_2(%arg0: i32) -> (i32, i32) {
    %c0_i32 = arith.constant 0 : i32
    %c0_i32_0 = arith.constant 0 : i32
    %c0_i32_1 = arith.constant 0 : i32
    return %c0_i32, %c0_i32_0 : i32, i32
  }
  func.func @transform_3(%arg0: i32) -> (i32, i32) {
    %c0_i32 = arith.constant 0 : i32
    %c0_i32_0 = arith.constant 0 : i32
    %c0_i32_1 = arith.constant 0 : i32
    return %c0_i32, %c0_i32_0 : i32, i32
  }
  func.func @transform_4(%arg0: i32) -> (i32, i32) {
    %c0_i32 = arith.constant 0 : i32
    %c0_i32_0 = arith.constant 0 : i32
    %c0_i32_1 = arith.constant 0 : i32
    return %c0_i32, %c0_i32_0 : i32, i32
  }
  func.func @transform_5(%arg0: i32) -> (i32, i32) {
    %c0_i32 = arith.constant 0 : i32
    %c0_i32_0 = arith.constant 0 : i32
    %c0_i32_1 = arith.constant 0 : i32
    return %c0_i32, %c0_i32_0 : i32, i32
  }
  func.func @transform_6(%arg0: i32) -> (i32, i32) {
    %c0_i32 = arith.constant 0 : i32
    %c0_i32_0 = arith.constant 0 : i32
    %c0_i32_1 = arith.constant 0 : i32
    return %c0_i32, %c0_i32_0 : i32, i32
  }
  func.func @transform_7(%arg0: i32) -> (i32, i32) {
    %c0_i32 = arith.constant 0 : i32
    %c0_i32_0 = arith.constant 0 : i32
    %c0_i32_1 = arith.constant 0 : i32
    return %c0_i32, %c0_i32_0 : i32, i32
  }
  func.func @transform_8(%arg0: i32) -> (i32, i32) {
    %c0_i32 = arith.constant 0 : i32
    %c0_i32_0 = arith.constant 0 : i32
    %c0_i32_1 = arith.constant 0 : i32
    return %c0_i32, %c0_i32_0 : i32, i32
  }
  func.func @transform_9(%arg0: i32) -> (i32, i32) {
    %c0_i32 = arith.constant 0 : i32
    %c0_i32_0 = arith.constant 0 : i32
    %c0_i32_1 = arith.constant 0 : i32
    return %c0_i32, %c0_i32_0 : i32, i32
  }
  func.func @transform_10(%arg0: i32) -> (i32, i32) {
    %c0_i32 = arith.constant 0 : i32
    %c0_i32_0 = arith.constant 0 : i32
    %c0_i32_1 = arith.constant 0 : i32
    return %c0_i32, %c0_i32_0 : i32, i32
  }
}

</mosaic_0001>

<llo_original>
// kernel: tpu_custom_call.1
$region0: #{tpu_custom_call.1}
  #allocation0 [shape = 'u32[]', space=smem, size = 0x4, offset = 0x4, fixed_abs, tag = 'smem constant byte address 0x4 - core index']
  #allocation1 [shape = 'u32[72,128]{1,0:T(1,128)}', space=vmem, size = 0x9000, scoped, tag = 'internal scratch']
  %s0 = inlined_call_operand.vmem [shape: f32[16,64], index: 0, kind: input, shape index: {}]
  %s1 = inlined_call_operand.vmem [shape: f32[16,16], index: 1, kind: input, shape index: {}]
  %s2 = inlined_call_operand.vmem [shape: bf16[64,32], index: 2, kind: input, shape index: {}]
  %s3 = inlined_call_operand.vmem [shape: f32[1,32], index: 3, kind: input, shape index: {}]
  %s4 = inlined_call_operand.vmem [shape: bf16[32,32], index: 4, kind: input, shape index: {}]
  %s5 = inlined_call_operand.vmem [shape: f32[1,32], index: 5, kind: input, shape index: {}]
  %s6 = inlined_call_operand.hbm [shape: bf16[16,32], index: 6, kind: input, shape index: {}]
  %s7 = inlined_call_operand.vmem [shape: f32[1,32], index: 7, kind: input, shape index: {}]
  %s8 = inlined_call_operand.hbm [shape: bf16[32,64], index: 8, kind: input, shape index: {}]
  %s9 = inlined_call_operand.vmem [shape: f32[1,64], index: 9, kind: input, shape index: {}]
  %s10 = inlined_call_operand.hbm [shape: f32[1,1], index: 10, kind: output, shape index: {}]
  %s11 = sld [smem:[#allocation0]]
  $region89: #{tpu_custom_call.1} parent=0
    _
  %s13 = ssub.s32 1, %s11
  %s14 = scalar_select 0, %s13, %s11
  $region1: #{tpu_custom_call.1} parent=0
    #allocation2 [shape = 'u8[4096]{0}', space=vmem, size = 0x1000, scoped, tag = 'input window, operand 6, single buffered']
    #allocation3 [shape = 's32[2]{0}', space=sflag, size = 0x8, scoped, tag = 'scoped memory for tpu_custom_call.1']
    #allocation4 [shape = 's32[2]{0}', space=sflag, size = 0x8, scoped, tag = 'scoped memory for tpu_custom_call.1']
    #allocation5 [shape = 'u8[8192]{0}', space=vmem, size = 0x2000, scoped, tag = 'input window, operand 8, single buffered']
    #allocation6 [shape = 's32[1]{0}', space=sflag, size = 0x4, scoped, tag = 'scoped memory for tpu_custom_call.1']
    #allocation7 [shape = 'u8[512]{0}', space=vmem, size = 0x400, scoped, tag = 'output window, operand 0, single buffered']
    %15 = vsyncpa [#allocation3], 0
    %16 = vsyncpa [#allocation6], 0
    %17 = vsyncpa [#allocation4], 0
    loop: start=0, step=1, limit=4
    $region2: #{tpu_custom_call.1} parent=1 // loop_pre_header
      _
    $region3: #{tpu_custom_call.1} parent=1 // loop_header
      %s19 = sphi 0, %s23
      %p20 = scmp.ge.s32.totalorder %s19, 4
      %s29 = sphi 0, %s31
      %s32 = sphi 0, %s29
      %s33 = sphi 0, %s32
      %s49 = sphi 0, %s33
      %s55 = sphi 0, %s57
      %s58 = sphi 0, %s55
      %s59 = sphi 0, %s58
      %s75 = sphi 0, %s59
      %s79 = sphi 0, %s79
      %s81 = sphi 0, %s79
      %s82 = sphi 0, %s81
      %s96 = sphi 0, %s82
      %s100 = sphi 0, %s100
      %s102 = sphi 0, %s100
      %s103 = sphi 0, %s102
      %s117 = sphi 0, %s103
      %s121 = sphi 0, %s121
      %s123 = sphi 0, %s121
      %s124 = sphi 0, %s123
      %s138 = sphi 0, %s124
      %s142 = sphi 0, %s142
      %s144 = sphi 0, %s142
      %s145 = sphi 0, %s144
      %s159 = sphi 0, %s145
      %s163 = sphi 0, %s163
      %s165 = sphi 0, %s163
      %s166 = sphi 0, %s165
      %s180 = sphi 0, %s166
      %s184 = sphi 0, %s184
      %s186 = sphi 0, %s184
      %s187 = sphi 0, %s186
      %s201 = sphi 0, %s187
      %s205 = sphi 0, %s205
      %s207 = sphi 0, %s205
      %s208 = sphi 0, %s207
      %s222 = sphi 0, %s208
      %s226 = sphi 0, %s226
      %s228 = sphi 0, %s226
      %s229 = sphi 0, %s228
      %s243 = sphi 0, %s229
      %s247 = sphi 0, %s247
      %s249 = sphi 0, %s247
      %s250 = sphi 0, %s249
      %s264 = sphi 0, %s250
    $region4: #{tpu_custom_call.1} parent=1 // loop_header_branch
      %22 = sbr.rel (%p20) target = $region8
    $region5: #{tpu_custom_call.1} parent=1 // loop_body
      %s24 = ssub.s32 %s19, 1
      %s25 = ssub.s32 %s19, 2
      %s26 = sadd.s32 %s19, 1
      %s27 = ssub.s32 %s19, %s26
      %p28 = scmp.eq.s32.totalorder %s27, 0
      %s30 = sadd.s32 %s29, 1
      %s31 = scalar_select %p28, %s29, %s30
      %p34 = pneg %p28
      %p35 = scmp.eq.s32.totalorder %s19, 1
      %p36 = por %p34, %p35
      %p37 = scmp.ne.s32.totalorder %s29, %s32
      %p38 = scmp.eq.s32.totalorder %s19, 0
      %p39 = por %p37, %p38
      %p40 = scmp.ne.s32.totalorder %s29, %s32
      %p41 = scmp.eq.s32.totalorder %s24, 1
      %p42 = por %p40, %p41
      %p43 = scmp.ne.s32.totalorder %s32, %s33
      %p44 = scmp.eq.s32.totalorder %s24, 0
      %p45 = por %p43, %p44
      %p46 = scmp.ne.s32.totalorder %s32, %s33
      %p47 = scmp.eq.s32.totalorder %s25, 1
      %p48 = por %p46, %p47
      %p50 = scmp.ne.s32.totalorder %s33, %s49
      %p51 = scmp.eq.s32.totalorder %s25, 0
      %p52 = por %p50, %p51
      %s53 = ssub.s32 %s19, %s26
      %p54 = scmp.eq.s32.totalorder %s53, 0
      %s56 = sadd.s32 %s55, 1
      %s57 = scalar_select %p54, %s55, %s56
      %p60 = pneg %p54
      %p61 = scmp.eq.s32.totalorder %s19, 1
      %p62 = por %p60, %p61
      %p63 = scmp.ne.s32.totalorder %s55, %s58
      %p64 = scmp.eq.s32.totalorder %s19, 0
      %p65 = por %p63, %p64
      %p66 = scmp.ne.s32.totalorder %s55, %s58
      %p67 = scmp.eq.s32.totalorder %s24, 1
      %p68 = por %p66, %p67
      %p69 = scmp.ne.s32.totalorder %s58, %s59
      %p70 = scmp.eq.s32.totalorder %s24, 0
      %p71 = por %p69, %p70
      %p72 = scmp.ne.s32.totalorder %s58, %s59
      %p73 = scmp.eq.s32.totalorder %s25, 1
      %p74 = por %p72, %p73
      %p76 = scmp.ne.s32.totalorder %s59, %s75
      %p77 = scmp.eq.s32.totalorder %s25, 0
      %p78 = por %p76, %p77
      %s80 = sadd.s32 %s79, 1
      %p83 = scmp.eq.s32.totalorder %s19, 1
      %p84 = scmp.ne.s32.totalorder %s79, %s81
      %p85 = scmp.eq.s32.totalorder %s19, 0
      %p86 = por %p84, %p85
      %p87 = scmp.ne.s32.totalorder %s79, %s81
      %p88 = scmp.eq.s32.totalorder %s24, 1
      %p89 = por %p87, %p88
      %p90 = scmp.ne.s32.totalorder %s81, %s82
      %p91 = scmp.eq.s32.totalorder %s24, 0
      %p92 = por %p90, %p91
      %p93 = scmp.ne.s32.totalorder %s81, %s82
      %p94 = scmp.eq.s32.totalorder %s25, 1
      %p95 = por %p93, %p94
      %p97 = scmp.ne.s32.totalorder %s82, %s96
      %p98 = scmp.eq.s32.totalorder %s25, 0
      %p99 = por %p97, %p98
      %s101 = sadd.s32 %s100, 1
      %p104 = scmp.eq.s32.totalorder %s19, 1
      %p105 = scmp.ne.s32.totalorder %s100, %s102
      %p106 = scmp.eq.s32.totalorder %s19, 0
      %p107 = por %p105, %p106
      %p108 = scmp.ne.s32.totalorder %s100, %s102
      %p109 = scmp.eq.s32.totalorder %s24, 1
      %p110 = por %p108, %p109
      %p111 = scmp.ne.s32.totalorder %s102, %s103
      %p112 = scmp.eq.s32.totalorder %s24, 0
      %p113 = por %p111, %p112
      %p114 = scmp.ne.s32.totalorder %s102, %s103
      %p115 = scmp.eq.s32.totalorder %s25, 1
      %p116 = por %p114, %p115
      %p118 = scmp.ne.s32.totalorder %s103, %s117
      %p119 = scmp.eq.s32.totalorder %s25, 0
      %p120 = por %p118, %p119
      %s122 = sadd.s32 %s121, 1
      %p125 = scmp.eq.s32.totalorder %s19, 1
      %p126 = scmp.ne.s32.totalorder %s121, %s123
      %p127 = scmp.eq.s32.totalorder %s19, 0
      %p128 = por %p126, %p127
      %p129 = scmp.ne.s32.totalorder %s121, %s123
      %p130 = scmp.eq.s32.totalorder %s24, 1
      %p131 = por %p129, %p130
      %p132 = scmp.ne.s32.totalorder %s123, %s124
      %p133 = scmp.eq.s32.totalorder %s24, 0
      %p134 = por %p132, %p133
      %p135 = scmp.ne.s32.totalorder %s123, %s124
      %p136 = scmp.eq.s32.totalorder %s25, 1
      %p137 = por %p135, %p136
      %p139 = scmp.ne.s32.totalorder %s124, %s138
      %p140 = scmp.eq.s32.totalorder %s25, 0
      %p141 = por %p139, %p140
      %s143 = sadd.s32 %s142, 1
      %p146 = scmp.eq.s32.totalorder %s19, 1
      %p147 = scmp.ne.s32.totalorder %s142, %s144
      %p148 = scmp.eq.s32.totalorder %s19, 0
      %p149 = por %p147, %p148
      %p150 = scmp.ne.s32.totalorder %s142, %s144
      %p151 = scmp.eq.s32.totalorder %s24, 1
      %p152 = por %p150, %p151
      %p153 = scmp.ne.s32.totalorder %s144, %s145
      %p154 = scmp.eq.s32.totalorder %s24, 0
      %p155 = por %p153, %p154
      %p156 = scmp.ne.s32.totalorder %s144, %s145
      %p157 = scmp.eq.s32.totalorder %s25, 1
      %p158 = por %p156, %p157
      %p160 = scmp.ne.s32.totalorder %s145, %s159
      %p161 = scmp.eq.s32.totalorder %s25, 0
      %p162 = por %p160, %p161
      %s164 = sadd.s32 %s163, 1
      %p167 = scmp.eq.s32.totalorder %s19, 1
      %p168 = scmp.ne.s32.totalorder %s163, %s165
      %p169 = scmp.eq.s32.totalorder %s19, 0
      %p170 = por %p168, %p169
      %p171 = scmp.ne.s32.totalorder %s163, %s165
      %p172 = scmp.eq.s32.totalorder %s24, 1
      %p173 = por %p171, %p172
      %p174 = scmp.ne.s32.totalorder %s165, %s166
      %p175 = scmp.eq.s32.totalorder %s24, 0
      %p176 = por %p174, %p175
      %p177 = scmp.ne.s32.totalorder %s165, %s166
      %p178 = scmp.eq.s32.totalorder %s25, 1
      %p179 = por %p177, %p178
      %p181 = scmp.ne.s32.totalorder %s166, %s180
      %p182 = scmp.eq.s32.totalorder %s25, 0
      %p183 = por %p181, %p182
      %s185 = sadd.s32 %s184, 1
      %p188 = scmp.eq.s32.totalorder %s19, 1
      %p189 = scmp.ne.s32.totalorder %s184, %s186
      %p190 = scmp.eq.s32.totalorder %s19, 0
      %p191 = por %p189, %p190
      %p192 = scmp.ne.s32.totalorder %s184, %s186
      %p193 = scmp.eq.s32.totalorder %s24, 1
      %p194 = por %p192, %p193
      %p195 = scmp.ne.s32.totalorder %s186, %s187
      %p196 = scmp.eq.s32.totalorder %s24, 0
      %p197 = por %p195, %p196
      %p198 = scmp.ne.s32.totalorder %s186, %s187
      %p199 = scmp.eq.s32.totalorder %s25, 1
      %p200 = por %p198, %p199
      %p202 = scmp.ne.s32.totalorder %s187, %s201
      %p203 = scmp.eq.s32.totalorder %s25, 0
      %p204 = por %p202, %p203
      %s206 = sadd.s32 %s205, 1
      %p209 = scmp.eq.s32.totalorder %s19, 1
      %p210 = scmp.ne.s32.totalorder %s205, %s207
      %p211 = scmp.eq.s32.totalorder %s19, 0
      %p212 = por %p210, %p211
      %p213 = scmp.ne.s32.totalorder %s205, %s207
      %p214 = scmp.eq.s32.totalorder %s24, 1
      %p215 = por %p213, %p214
      %p216 = scmp.ne.s32.totalorder %s207, %s208
      %p217 = scmp.eq.s32.totalorder %s24, 0
      %p218 = por %p216, %p217
      %p219 = scmp.ne.s32.totalorder %s207, %s208
      %p220 = scmp.eq.s32.totalorder %s25, 1
      %p221 = por %p219, %p220
      %p223 = scmp.ne.s32.totalorder %s208, %s222
      %p224 = scmp.eq.s32.totalorder %s25, 0
      %p225 = por %p223, %p224
      %s227 = sadd.s32 %s226, 1
      %p230 = scmp.eq.s32.totalorder %s19, 1
      %p231 = scmp.ne.s32.totalorder %s226, %s228
      %p232 = scmp.eq.s32.totalorder %s19, 0
      %p233 = por %p231, %p232
      %p234 = scmp.ne.s32.totalorder %s226, %s228
      %p235 = scmp.eq.s32.totalorder %s24, 1
      %p236 = por %p234, %p235
      %p237 = scmp.ne.s32.totalorder %s228, %s229
      %p238 = scmp.eq.s32.totalorder %s24, 0
      %p239 = por %p237, %p238
      %p240 = scmp.ne.s32.totalorder %s228, %s229
      %p241 = scmp.eq.s32.totalorder %s25, 1
      %p242 = por %p240, %p241
      %p244 = scmp.ne.s32.totalorder %s229, %s243
      %p245 = scmp.eq.s32.totalorder %s25, 0
      %p246 = por %p244, %p245
      %s248 = sadd.s32 %s247, 1
      %p251 = scmp.eq.s32.totalorder %s19, 1
      %p252 = scmp.ne.s32.totalorder %s247, %s249
      %p253 = scmp.eq.s32.totalorder %s19, 0
      %p254 = por %p252, %p253
      %p255 = scmp.ne.s32.totalorder %s247, %s249
      %p256 = scmp.eq.s32.totalorder %s24, 1
      %p257 = por %p255, %p256
      %p258 = scmp.ne.s32.totalorder %s249, %s250
      %p259 = scmp.eq.s32.totalorder %s24, 0
      %p260 = por %p258, %p259
      %p261 = scmp.ne.s32.totalorder %s249, %s250
      %p262 = scmp.eq.s32.totalorder %s25, 1
      %p263 = por %p261, %p262
      %p265 = scmp.ne.s32.totalorder %s250, %s264
      %p266 = scmp.eq.s32.totalorder %s25, 0
      %p267 = por %p265, %p266
      %p268 = scmp.le.s32.totalorder 1, %s19
      %p269 = scmp.lt.s32.totalorder %s19, 3
      %p270 = pnand %p268, %p269
      %p271 = pneg %p270
      // Predicated region
      $region9: #{tpu_custom_call.1} parent=5 // pred_check
        _
      $region10: #{tpu_custom_call.1} parent=5 // pred_check_branch
        %273 = sbr.rel (%p270) target = $region12
      $region11: #{tpu_custom_call.1} parent=5 // pred_region
        %s274 = ssub.s32 %s19, 1
        // Predicated region
        $region13: #{tpu_custom_call.1} parent=11 // pred_check
          %p275 = pneg %p92
        $region14: #{tpu_custom_call.1} parent=11 // pred_check_branch
          %277 = sbr.rel (%p275) target = $region16
        $region15: #{tpu_custom_call.1} parent=11 // pred_region
          _
        $region16: #{tpu_custom_call.1} parent=11 // pred_fallthru
          _
        // Predicated region
        $region17: #{tpu_custom_call.1} parent=11 // pred_check
          %p278 = pneg %p113
        $region18: #{tpu_custom_call.1} parent=11 // pred_check_branch
          %280 = sbr.rel (%p278) target = $region20
        $region19: #{tpu_custom_call.1} parent=11 // pred_region
          _
        $region20: #{tpu_custom_call.1} parent=11 // pred_fallthru
          _
        // Predicated region
        $region21: #{tpu_custom_call.1} parent=11 // pred_check
          %p281 = pneg %p134
        $region22: #{tpu_custom_call.1} parent=11 // pred_check_branch
          %283 = sbr.rel (%p281) target = $region24
        $region23: #{tpu_custom_call.1} parent=11 // pred_region
          _
        $region24: #{tpu_custom_call.1} parent=11 // pred_fallthru
          _
        // Predicated region
        $region25: #{tpu_custom_call.1} parent=11 // pred_check
          %p284 = pneg %p155
        $region26: #{tpu_custom_call.1} parent=11 // pred_check_branch
          %286 = sbr.rel (%p284) target = $region28
        $region27: #{tpu_custom_call.1} parent=11 // pred_region
          _
        $region28: #{tpu_custom_call.1} parent=11 // pred_fallthru
          _
        // Predicated region
        $region29: #{tpu_custom_call.1} parent=11 // pred_check
          %p287 = pneg %p176
        $region30: #{tpu_custom_call.1} parent=11 // pred_check_branch
          %289 = sbr.rel (%p287) target = $region32
        $region31: #{tpu_custom_call.1} parent=11 // pred_region
          %291 = vsyncadd [#allocation3], 0
          %s292 = sshll.u32 %s6, 4
          %s293 = int_to_ptr.hbm [resolvable:$true] %s292
          %s294 = sshll.u32 [#allocation2], 4
          %s295 = int_to_ptr.vmem [resolvable:$true] %s294
          %300 = dma.hbm_to_vmem [thread:$0]  %s293, 128, %s295, [#allocation3], 64, 64, 4
        $region32: #{tpu_custom_call.1} parent=11 // pred_fallthru
          _
        // Predicated region
        $region33: #{tpu_custom_call.1} parent=11 // pred_check
          %p301 = pneg %p197
        $region34: #{tpu_custom_call.1} parent=11 // pred_check_branch
          %303 = sbr.rel (%p301) target = $region36
        $region35: #{tpu_custom_call.1} parent=11 // pred_region
          _
        $region36: #{tpu_custom_call.1} parent=11 // pred_fallthru
          _
        // Predicated region
        $region37: #{tpu_custom_call.1} parent=11 // pred_check
          %p304 = pneg %p218
        $region38: #{tpu_custom_call.1} parent=11 // pred_check_branch
          %306 = sbr.rel (%p304) target = $region40
        $region39: #{tpu_custom_call.1} parent=11 // pred_region
          %308 = vsyncadd [#allocation6], 0
          %s309 = sshll.u32 %s8, 4
          %s310 = int_to_ptr.hbm [resolvable:$true] %s309
          %s311 = sshll.u32 [#allocation5], 4
          %s312 = int_to_ptr.vmem [resolvable:$true] %s311
          %317 = dma.hbm_to_vmem [thread:$0]  %s310, 256, %s312, [#allocation6], 64, 64, 4
        $region40: #{tpu_custom_call.1} parent=11 // pred_fallthru
          _
        // Predicated region
        $region41: #{tpu_custom_call.1} parent=11 // pred_check
          %p318 = pneg %p239
        $region42: #{tpu_custom_call.1} parent=11 // pred_check_branch
          %320 = sbr.rel (%p318) target = $region44
        $region43: #{tpu_custom_call.1} parent=11 // pred_region
          _
        $region44: #{tpu_custom_call.1} parent=11 // pred_fallthru
          _
      $region12: #{tpu_custom_call.1} parent=5 // pred_fallthru
        _
      %p321 = scmp.lt.s32.totalorder %s19, 2
      // Predicated region
      $region45: #{tpu_custom_call.1} parent=5 // pred_check
        %p322 = pneg %p321
      $region46: #{tpu_custom_call.1} parent=5 // pred_check_branch
        %324 = sbr.rel (%p322) target = $region48
      $region47: #{tpu_custom_call.1} parent=5 // pred_region
        // Predicated region
        $region49: #{tpu_custom_call.1} parent=47 // pred_check
          %p325 = pneg %p39
        $region50: #{tpu_custom_call.1} parent=47 // pred_check_branch
          %327 = sbr.rel (%p325) target = $region52
        $region51: #{tpu_custom_call.1} parent=47 // pred_region
          %p328 = scmp.lt.s32.totalorder %s19, 1
          %s329 = scalar_select %p328, %s19, 1
          %s330 = smul.addr %s329, 8
          %s331 = scalar_lea.vmem %s0, %s330
        $region52: #{tpu_custom_call.1} parent=47 // pred_fallthru
          _
        // Predicated region
        $region53: #{tpu_custom_call.1} parent=47 // pred_check
          %p332 = pneg %p65
        $region54: #{tpu_custom_call.1} parent=47 // pred_check_branch
          %334 = sbr.rel (%p332) target = $region56
        $region55: #{tpu_custom_call.1} parent=47 // pred_region
          %p335 = scmp.lt.s32.totalorder %s19, 1
          %s336 = scalar_select %p335, %s19, 1
          %s337 = smul.addr %s336, 8
          %s338 = scalar_lea.vmem %s1, %s337
        $region56: #{tpu_custom_call.1} parent=47 // pred_fallthru
          _
      $region48: #{tpu_custom_call.1} parent=5 // pred_fallthru
        _
      %p339 = scmp.le.s32.totalorder 1, %s19
      %p340 = scmp.lt.s32.totalorder %s19, 3
      %p341 = pnand %p339, %p340
      %p342 = pneg %p341
      // Predicated region
      $region57: #{tpu_custom_call.1} parent=5 // pred_check
        _
      $region58: #{tpu_custom_call.1} parent=5 // pred_check_branch
        %344 = sbr.rel (%p341) target = $region60
      $region59: #{tpu_custom_call.1} parent=5 // pred_region
        %s345 = ssub.s32 %s19, 1
        // Predicated region
        $region61: #{tpu_custom_call.1} parent=59 // pred_check
          %p346 = pneg %p176
        $region62: #{tpu_custom_call.1} parent=59 // pred_check_branch
          %348 = sbr.rel (%p346) target = $region64
        $region63: #{tpu_custom_call.1} parent=59 // pred_region
          %350 = dma.done [#allocation3], 128
        $region64: #{tpu_custom_call.1} parent=59 // pred_fallthru
          _
        // Predicated region
        $region65: #{tpu_custom_call.1} parent=59 // pred_check
          %p351 = pneg %p218
        $region66: #{tpu_custom_call.1} parent=59 // pred_check_branch
          %353 = sbr.rel (%p351) target = $region68
        $region67: #{tpu_custom_call.1} parent=59 // pred_region
          %355 = dma.done [#allocation6], 256
        $region68: #{tpu_custom_call.1} parent=59 // pred_fallthru
          _
        %p356 = scmp.lt.s32.totalorder %s24, 1
        %s357 = scalar_select %p356, %s24, 1
        %s358 = smul.addr %s357, 8
        %s359 = scalar_lea.vmem %s0, %s358
        %p360 = pneg %p45
        %p361 = pneg %p42
        %p362 = scmp.lt.s32.totalorder %s24, 1
        %s363 = scalar_select %p362, %s24, 1
        %s364 = smul.addr %s363, 8
        %s365 = scalar_lea.vmem %s1, %s364
        %p366 = pneg %p71
        %p367 = pneg %p68
        %p368 = pneg %p92
        %p369 = pneg %p89
        %p370 = pneg %p113
        %p371 = pneg %p110
        %p372 = pneg %p134
        %p373 = pneg %p131
        %p374 = pneg %p155
        %p375 = pneg %p152
        %p376 = pneg %p176
        %p377 = pneg %p173
        %p378 = pneg %p197
        %p379 = pneg %p194
        %p380 = pneg %p218
        %p381 = pneg %p215
        %p382 = pneg %p239
        %p383 = pneg %p236
        %p384 = pneg %p260
        %p385 = pneg %p257
        %p386 = scmp.lt.s32.totalorder %s24, 1
        %s387 = scalar_select %p386, %s24, 1
        %s388 = smul.addr %s387, 8
        %s389 = scalar_lea.vmem %s0, %s388
        %p390 = scmp.lt.s32.totalorder %s24, 1
        %s391 = scalar_select %p390, %s24, 1
        %s392 = smul.addr %s391, 8
        %s393 = scalar_lea.vmem %s1, %s392
        %p395 = scmp.eq.s32.totalorder %s24, 0
        // Predicated region
        $region69: #{tpu_custom_call.1} parent=59 // pred_check
          %p396 = pneg %p395
        $region70: #{tpu_custom_call.1} parent=59 // pred_check_branch
          %398 = sbr.rel (%p396) target = $region72
        $region71: #{tpu_custom_call.1} parent=59 // pred_region
          %vm399 = vcmask 0
          %400 = vst.msk [vmem:[#allocation7] sm:$0x1] %vm399, 0.0
        $region72: #{tpu_custom_call.1} parent=59 // pred_fallthru
          _
        %v401 = vld [vmem:[%s389] sm:$0xff]
        %v402 = vld [vmem:[%s393] sm:$0xff]
        %v403 = vpack.c.bf16 %v401, %v401
        %v404 = vld [vmem:[%s2] sm:$0xf]
        %v405 = vld [vmem:[%s2 + $0x4] sm:$0xf]
        %v406 = vld [vmem:[%s2 + $0x8] sm:$0xf]
        %v407 = vld [vmem:[%s2 + $0xc] sm:$0xf]
        %v408 = vld [vmem:[%s2 + $0x10] sm:$0xf]
        %v409 = vld [vmem:[%s2 + $0x14] sm:$0xf]
        %v410 = vld [vmem:[%s2 + $0x18] sm:$0xf]
        %v411 = vld [vmem:[%s2 + $0x1c] sm:$0xf]
        %v412 = vld [vmem:[%s3] sm:$0x1]
        %v414 = vperm.slane %v412, 0
        %v424 = vunpack.c.l.b16 %v404
        %v425 = vunpack.c.l.b16 %v405
        %v426 = vunpack.c.l.b16 %v406
        %v427 = vunpack.c.l.b16 %v407
        %v428 = vunpack.c.l.b16 %v408
        %v429 = vunpack.c.l.b16 %v409
        %v430 = vunpack.c.l.b16 %v410
        %v431 = vunpack.c.l.b16 %v411
        %v432 = vpack.c.b16 %v425, %v424
        %v433 = vpack.c.b16 %v427, %v426
        %v434 = vpack.c.b16 %v429, %v428
        %v435 = vpack.c.b16 %v431, %v430
        %vm440 = vcmask 523264
        %v442 = vsel %vm440, %v403, 0
        %444 = vmatpush.bf16.msra.mxu0 0
        %445 = vmatpush.bf16.msra.mxu0 0
        %446 = vmatpush.bf16.msra.mxu0 0
        %447 = vmatpush.bf16.msra.mxu0 0
        %448 = vmatpush.bf16.msra.mxu0 %v435
        %449 = vmatpush.bf16.msra.mxu0 %v434
        %450 = vmatpush.bf16.msra.mxu0 %v433
        %451 = vmatpush.bf16.msra.mxu0 %v432
        %452 = vmatmul.bf16.gmra.mxu0 %v442
        %v453 = vpop.f32.mrf.mxu0
        %v454 = vadd.f32 %v414, %v453
        %v455 = vpop.f32.mrf.mxu0
        %456 = vdwg.mxu0
        %v457 = vtanh.pop %v454
        %v458 = vpack.c.bf16 %v457, %v457
        %v459 = vld [vmem:[%s4] sm:$0xf]
        %v460 = vld [vmem:[%s4 + $0x4] sm:$0xf]
        %v461 = vld [vmem:[%s4 + $0x8] sm:$0xf]
        %v462 = vld [vmem:[%s4 + $0xc] sm:$0xf]
        %v463 = vld [vmem:[%s5] sm:$0x1]
        %v465 = vperm.slane %v463, 0
        %v471 = vunpack.c.l.b16 %v459
        %v472 = vunpack.c.l.b16 %v460
        %v473 = vunpack.c.l.b16 %v461
        %v474 = vunpack.c.l.b16 %v462
        %v475 = vpack.c.b16 %v472, %v471
        %v476 = vpack.c.b16 %v474, %v473
        %vm479 = vcmask 261120
        %v481 = vsel %vm479, %v458, 0
        %483 = vmatpush.bf16.msra.mxu0 0
        %484 = vmatpush.bf16.msra.mxu0 0
        %485 = vmatpush.bf16.msra.mxu0 0
        %486 = vmatpush.bf16.msra.mxu0 0
        %487 = vmatpush.bf16.msra.mxu0 0
        %488 = vmatpush.bf16.msra.mxu0 0
        %489 = vmatpush.bf16.msra.mxu0 %v476
        %490 = vmatpush.bf16.msra.mxu0 %v475
        %491 = vmatmul.bf16.gmra.mxu0 %v481
        %v492 = vpop.f32.mrf.mxu0
        %v493 = vadd.f32 %v465, %v492
        %v494 = vpop.f32.mrf.mxu0
        %495 = vdwg.mxu0
        %v496 = vmul.f32 %v493, 1.442695
        %v497 = vpow.pop %v496
        %v498 = vmul.f32 %v497, 0.5
        %v499 = vmul.f32 %v498, 1.442695
        %v500 = vpow.pop %v499
        %502 = vrot.lane.b32.xlu0 %v402, 16
        %v503 = vpop.permute.xlu0 %502
        %v505 = vmul.f32 %v500, %v503
        %507 = vrot.lane.b32.xlu0 %v505, 112
        %v508 = vpop.permute.xlu0 %507
        %v510 = vadd.f32 %v493, %v508
        %v511 = vpack.c.bf16 %v510, %v510
        %v512 = vld [vmem:[#allocation2] sm:$0xf]
        %v513 = vld [vmem:[#allocation2 + $0x4] sm:$0xf]
        %v514 = vld [vmem:[%s7] sm:$0x1]
        %v516 = vperm.slane %v514, 0
        %v520 = vunpack.c.l.b16 %v512
        %v521 = vunpack.c.l.b16 %v513
        %v522 = vpack.c.b16 %v521, %v520
        %vm524 = vcmask 130048
        %v526 = vsel %vm524, %v511, 0
        %528 = vmatpush.bf16.msra.mxu0 0
        %529 = vmatpush.bf16.msra.mxu0 0
        %530 = vmatpush.bf16.msra.mxu0 0
        %531 = vmatpush.bf16.msra.mxu0 0
        %532 = vmatpush.bf16.msra.mxu0 0
        %533 = vmatpush.bf16.msra.mxu0 0
        %534 = vmatpush.bf16.msra.mxu0 0
        %535 = vmatpush.bf16.msra.mxu0 %v522
        %536 = vmatmul.bf16.gmra.mxu0 %v526
        %v537 = vpop.f32.mrf.mxu0
        %v538 = vadd.f32 %v516, %v537
        %v539 = vpop.f32.mrf.mxu0
        %540 = vdwg.mxu0
        %v541 = vtanh.pop %v538
        %v542 = vpack.c.bf16 %v541, %v541
        %v543 = vld [vmem:[#allocation5] sm:$0xf]
        %v544 = vld [vmem:[#allocation5 + $0x4] sm:$0xf]
        %v545 = vld [vmem:[#allocation5 + $0x8] sm:$0xf]
        %v546 = vld [vmem:[#allocation5 + $0xc] sm:$0xf]
        %v547 = vld [vmem:[%s9] sm:$0x1]
        %v549 = vperm.slane %v547, 0
        %v555 = vunpack.c.l.b16 %v543
        %v556 = vunpack.c.l.b16 %v544
        %v557 = vunpack.c.l.b16 %v545
        %v558 = vunpack.c.l.b16 %v546
        %v559 = vpack.c.b16 %v556, %v555
        %v560 = vpack.c.b16 %v558, %v557
        %v564 = vsel %vm479, %v542, 0
        %566 = vmatpush.bf16.msra.mxu0 0
        %567 = vmatpush.bf16.msra.mxu0 0
        %568 = vmatpush.bf16.msra.mxu0 0
        %569 = vmatpush.bf16.msra.mxu0 0
        %570 = vmatpush.bf16.msra.mxu0 0
        %571 = vmatpush.bf16.msra.mxu0 0
        %572 = vmatpush.bf16.msra.mxu0 %v560
        %573 = vmatpush.bf16.msra.mxu0 %v559
        %574 = vmatmul.bf16.gmra.mxu0 %v564
        %v575 = vpop.f32.mrf.mxu0
        %v576 = vadd.f32 %v549, %v575
        %v577 = vpop.f32.mrf.mxu0
        %578 = vdwg.mxu0
        %v579 = vsub.f32 %v401, %v576
        %v580 = vmul.f32 %v579, %v579
        %v581 = vsel %vm440, %v580, 0.0
        %582 = vadd.xlane.f32.xlu0 %v581
        %v583 = vpop.xlane.xlu0 %582
        %v584 = vrot.slane %v583, 4
        %v585 = vadd.f32 %v583, %v584
        %v586 = vrot.slane %v585, 2
        %v587 = vadd.f32 %v585, %v586
        %v588 = vrot.slane %v587, 1
        %v589 = vadd.f32 %v587, %v588
        %s590 = vtos %v589
        %s591 = smul.f32 %s590, 0.5
        %s592 = ssub.f32 -470.49652, %s591
        %v593 = vmul.f32 %v497, %v497
        %v594 = vmul.f32 %v493, %v493
        %596 = vrot.lane.b32.xlu0 %v594, 16
        %v597 = vpop.permute.xlu0 %596
        %v599 = vadd.f32 %v593, %v597
        %v600 = vmul.f32 %v599, 0.5
        %v601 = vsub.f32 %v600, %v493
        %603 = vrot.lane.b32.xlu0 %v601, 112
        %v604 = vpop.permute.xlu0 %603
        %v606 = vsel %vm524, %v604, 0.0
        %607 = vadd.xlane.f32.xlu0 %v606
        %v608 = vpop.xlane.xlu0 %607
        %v609 = vrot.slane %v608, 4
        %v610 = vadd.f32 %v608, %v609
        %v611 = vrot.slane %v610, 2
        %v612 = vadd.f32 %v610, %v611
        %v613 = vrot.slane %v612, 1
        %v614 = vadd.f32 %v612, %v613
        %s615 = vtos %v614
        %s616 = ssub.f32 %s615, 64.0
        %v617 = vld [vmem:[#allocation7] sm:$0x1]
        %s618 = sadd.f32 %s592, %s616
        %v619 = vstv %s618
        %v620 = vadd.f32 %v617, %v619
        %vm621 = vcmask 0
        %622 = vst.msk [vmem:[#allocation7] sm:$0x1] %vm621, %v620
        %p623 = scmp.eq.s32.totalorder %s24, 1
        // Predicated region
        $region73: #{tpu_custom_call.1} parent=59 // pred_check
          %p624 = pneg %p623
        $region74: #{tpu_custom_call.1} parent=59 // pred_check_branch
          %626 = sbr.rel (%p624) target = $region76
        $region75: #{tpu_custom_call.1} parent=59 // pred_region
          %v627 = vld [vmem:[#allocation7] sm:$0x1]
          %v628 = vsub.f32 0.0, %v627
          %v629 = vmul.f32 %v628, 0.0625
          %630 = vst.msk [vmem:[#allocation7] sm:$0x1] %vm621, %v629
        $region76: #{tpu_custom_call.1} parent=59 // pred_fallthru
          _
        // Predicated region
        $region77: #{tpu_custom_call.1} parent=59 // pred_check
          %p631 = pneg %p257
        $region78: #{tpu_custom_call.1} parent=59 // pred_check_branch
          %633 = sbr.rel (%p631) target = $region80
        $region79: #{tpu_custom_call.1} parent=59 // pred_region
          %635 = vsyncadd [#allocation4], 0
          %s637 = sshll.u32 [#allocation7], 4
          %s638 = int_to_ptr.vmem [resolvable:$true] %s637
          %s639 = sshll.u32 %s10, 4
          %s640 = int_to_ptr.hbm [resolvable:$true] %s639
          %642 = dma.vmem_to_hbm [thread:$0]  %s638, 16, %s640, [#allocation4]
        $region80: #{tpu_custom_call.1} parent=59 // pred_fallthru
          _
        // Predicated region
        $region81: #{tpu_custom_call.1} parent=59 // pred_check
          %p643 = pneg %p257
        $region82: #{tpu_custom_call.1} parent=59 // pred_check_branch
          %645 = sbr.rel (%p643) target = $region84
        $region83: #{tpu_custom_call.1} parent=59 // pred_region
          %647 = dma.done [#allocation4], 16
        $region84: #{tpu_custom_call.1} parent=59 // pred_fallthru
          _
      $region60: #{tpu_custom_call.1} parent=5 // pred_fallthru
        _
      %p648 = scmp.le.s32.totalorder 2, %s19
      // Predicated region
      $region85: #{tpu_custom_call.1} parent=5 // pred_check
        %p649 = pneg %p648
      $region86: #{tpu_custom_call.1} parent=5 // pred_check_branch
        %651 = sbr.rel (%p649) target = $region88
      $region87: #{tpu_custom_call.1} parent=5 // pred_region
        %s652 = ssub.s32 %s19, 2
      $region88: #{tpu_custom_call.1} parent=5 // pred_fallthru
        _
    $region6: #{tpu_custom_call.1} parent=1 // loop_footer
      %s23 = sadd.s32 1, %s19
    $region7: #{tpu_custom_call.1} parent=1 // loop_footer_branch
      %18 = sbr.rel target = $region3
    $region8: #{tpu_custom_call.1} parent=1 // loop_exit
      _
    %653 = vsyncpa [#allocation3], 1
    %s654 = scalar_lea.sflag [#allocation3], 1
    %655 = vsyncpa %s654, 1
    %656 = vsyncpa [#allocation6], 1
    %657 = vsyncpa [#allocation4], 1
    %s658 = scalar_lea.sflag [#allocation4], 1
    %659 = vsyncpa %s658, 1

</llo_original>
